<compile_context>
chip_gen: v7x
topology: tpu7x:2x2x1
jax: 0.10.0
libtpu: 0.0.40
codegen_flags: <defaults>
</compile_context>

<pallas_src>
import jax
import jax.numpy as jnp
from jax.experimental import pallas as pl
from jax.experimental.pallas import tpu as pltpu


def _round_up(x, m):
    return ((x + m - 1) // m) * m


def text_encoder_kernel(tok_ref, htab_ref, w2_ref, b2_ref, out_ref):
    tok = tok_ref[...]                                       # (TB, S) int32 token ids
    TB, S = tok.shape
    Vp = htab_ref.shape[0]

    # get_text_field_mask: nonzero ids are real tokens.
    mask = (tok != 0).astype(jnp.float32)                    # (TB, S)
    counts = jnp.maximum(jnp.sum(mask, axis=1, keepdims=True), 1.0)    # (TB, 1)

    # Count matrix C[b, v] = #{s : tok[b, s] == v and v != 0}: 2-D iota + short static
    # loop over S (no 3-D intermediates).  Values are small integers -> exact in bf16.
    vocab_iota = jax.lax.broadcasted_iota(jnp.int32, (TB, Vp), 1)
    nonpad_col = vocab_iota > 0
    cmat = jnp.zeros((TB, Vp), jnp.float32)
    for s in range(S):
        hit = jnp.logical_and(vocab_iota == tok[:, s:s + 1], nonpad_col)
        cmat = cmat + hit.astype(jnp.float32)

    # Fused [embedding -> Linear(D->H)+ReLU -> masked sum]: one MXU matmul against the
    # precomputed H_table = relu(emb_table @ w1 + b1); divide by counts for the mean.
    pooled_sum = jnp.dot(cmat.astype(htab_ref.dtype), htab_ref[...],
                         preferred_element_type=jnp.float32)           # (TB, Hp)
    pooled = pooled_sum / counts                                        # masked mean, f32

    # feedforward: Linear(H -> F) + ReLU, lane-dense output block.
    out = jnp.dot(pooled.astype(w2_ref.dtype), w2_ref[...],
                  preferred_element_type=jnp.float32) + b2_ref[...]
    out_ref[...] = jnp.maximum(out, 0.0).astype(out_ref.dtype)


def text_encoder_forward(token_ids, emb_table, w1, b1, w2, b2, *,
                         batch_tile=256, mxu_dtype=jnp.bfloat16):
    """token_ids: (B, S) int; emb_table: (V, D); w1: (D, H); w2: (H, F). Returns (B, F) f32."""
    B, S = token_ids.shape
    V, D = emb_table.shape
    H = w1.shape[1]
    F = w2.shape[1]

    # Feature dims padded to 128 lanes; batch tile is a multiple of 8 sublanes.
    Vp = _round_up(V, 128)
    Hp = _round_up(H, 128)
    Fp = _round_up(F, 128)

    itemsize = jnp.dtype(mxu_dtype).itemsize

    # Generation-aware VMEM budget (leave ~25% headroom; never claim all of VMEM).
    try:
        vmem_cap = int(pltpu.get_tpu_info().vmem_capacity_bytes)
    except Exception:
        vmem_cap = 64 << 20
    budget = (3 * vmem_cap) // 4

    # Rough VMEM footprint model: resident weights + per-batch-row intermediates.
    resident = itemsize * (Vp * Hp + Hp * Fp) + 4 * Fp
    per_row = ((4 + 4 + 1 + itemsize) * Vp          # iota + bool hit + count matrix + bf16 copy
               + (4 + itemsize) * Hp                # pooled f32 + bf16 copy
               + (4 + 4) * Fp                       # out f32 + output block
               + 12 * S)                            # token ids + mask
    tb_cap = max(8, (((budget // 2 - 2 * resident) // max(per_row, 1)) // 8) * 8)

    # Batch tile: aim for a large MXU M-dimension on real batches, but keep >= 2 (even)
    # grid steps when the batch allows it, so v7x's two TensorCores both get work.
    TB = max(8, _round_up(min(batch_tile, tb_cap, max(B, 1)), 8))
    Bp = _round_up(B, TB)
    n_tiles = Bp // TB
    if n_tiles == 1 and B > 8:
        TB = max(8, _round_up((B + 1) // 2, 8))
        n_tiles = 2
        Bp = n_tiles * TB
    if n_tiles > 1 and n_tiles % 2 == 1:
        n_tiles += 1
        Bp = n_tiles * TB

    # One-time fold: the per-token Linear(D->H)+ReLU depends only on the token id.
    h_table = jnp.maximum(
        emb_table.astype(jnp.float32) @ w1.astype(jnp.float32)
        + jnp.reshape(b1, (1, H)).astype(jnp.float32), 0.0)             # (V, H) f32

    tok_p = jnp.zeros((Bp, S), jnp.int32).at[:B, :].set(token_ids.astype(jnp.int32))
    htab_p = jnp.zeros((Vp, Hp), mxu_dtype).at[:V, :H].set(h_table.astype(mxu_dtype))
    w2_p = jnp.zeros((Hp, Fp), mxu_dtype).at[:H, :F].set(w2.astype(mxu_dtype))
    b2_p = jnp.zeros((1, Fp), jnp.float32).at[:, :F].set(
        jnp.reshape(b2, (1, F)).astype(jnp.float32))

    # Advisory cost estimate so XLA can overlap surrounding ops with the kernel.
    flops = int(2 * Bp * Vp * Hp + 2 * Bp * Hp * Fp + 3 * Bp * S * Vp)
    bytes_accessed = int(4 * Bp * S + itemsize * (Vp * Hp + Hp * Fp) + 4 * Fp + 4 * Bp * Fp)
    cost = pl.CostEstimate(flops=flops, transcendentals=0, bytes_accessed=bytes_accessed)

    est = 2 * resident + 2 * (4 * TB * S + 4 * TB * Fp) + TB * per_row
    vmem_limit = int(min(budget, max(4 << 20, 2 * est)))

    def build(weight_pipeline_mode):
        wkw = ({} if weight_pipeline_mode is None
               else {"pipeline_mode": weight_pipeline_mode})
        return pl.pallas_call(
            text_encoder_kernel,
            out_shape=jax.ShapeDtypeStruct((Bp, Fp), jnp.float32),
            grid=(n_tiles,),
            in_specs=[
                pl.BlockSpec((TB, S), lambda i: (i, 0)),            # token ids: batch-tiled
                pl.BlockSpec((Vp, Hp), lambda i: (0, 0), **wkw),    # H_table: VMEM-resident
                pl.BlockSpec((Hp, Fp), lambda i: (0, 0), **wkw),    # w2:      VMEM-resident
                pl.BlockSpec((1, Fp), lambda i: (0, 0), **wkw),     # b2
            ],
            out_specs=pl.BlockSpec((TB, Fp), lambda i: (i, 0)),     # lane-dense output tile
            compiler_params=pltpu.CompilerParams(
                dimension_semantics=("parallel",),
                vmem_limit_bytes=vmem_limit,
            ),
            cost_estimate=cost,
        )

    try:
        # Constant-index blocks: single-buffering halves resident weight VMEM (v7x win).
        out_padded = build(pl.Buffered(1))(tok_p, htab_p, w2_p, b2_p)
    except Exception:
        # Fall back to default double-buffering if this jax version rejects Buffered(1).
        out_padded = build(None)(tok_p, htab_p, w2_p, b2_p)

    return out_padded[:B, :F]


if __name__ == "__main__":
    B, S, V, D, H, F = 16, 8, 50, 32, 32, 32

    key = jax.random.PRNGKey(0)
    k_tok, k_emb, k_w1, k_b1, k_w2, k_b2 = jax.random.split(key, 6)

    # Token ids in [1, V); a few positions padded (id 0) to exercise the mask.
    token_ids = jax.random.randint(k_tok, (B, S), 1, V, dtype=jnp.int32)
    token_ids = token_ids.at[1, S - 2:].set(0)
    token_ids = token_ids.at[7, S - 4:].set(0)
    token_ids = token_ids.at[12, S - 1:].set(0)

    emb_table = jax.random.normal(k_emb, (V, D), dtype=jnp.float32) * 0.1
    w1 = jax.random.normal(k_w1, (D, H), dtype=jnp.float32) * 0.1
    b1 = jax.random.normal(k_b1, (1, H), dtype=jnp.float32) * 0.1
    w2 = jax.random.normal(k_w2, (H, F), dtype=jnp.float32) * 0.1
    b2 = jax.random.normal(k_b2, (1, F), dtype=jnp.float32) * 0.1

    out = text_encoder_forward(token_ids, emb_table, w1, b1, w2, b2)
    out = jax.block_until_ready(out)

    # Pure-JAX f32 reference: embed -> Linear+ReLU -> masked mean -> Linear+ReLU.
    embedded = emb_table[token_ids]                              # (B, S, D)
    mask = (token_ids != 0).astype(jnp.float32)                  # (B, S)
    h = jnp.maximum(embedded @ w1 + b1, 0.0)                     # (B, S, H)
    pooled = (h * mask[:, :, None]).sum(1) / jnp.maximum(mask.sum(1, keepdims=True), 1.0)
    ref = jnp.maximum(pooled @ w2 + b2, 0.0)                     # (B, F)

    assert out.shape == (B, F)
    # bf16 MXU operands (f32 accumulation) => looser tolerance than the pure-f32 path.
    assert jnp.allclose(out, ref, atol=2e-2, rtol=2e-2), "mismatch vs reference"
    print("KERNEL_OK")
</pallas_src>

<mosaic_0001>
module attributes {stable_mosaic.version = 11 : i64} {
  func.func @text_encoder_kernel(%arg0: i32, %arg1: memref<8x8xi32, #tpu.memory_space<vmem>>, %arg2: memref<128x128xbf16, #tpu.memory_space<vmem>>, %arg3: memref<128x128xbf16, #tpu.memory_space<vmem>>, %arg4: memref<1x128xf32, #tpu.memory_space<vmem>>, %arg5: memref<8x128xf32, #tpu.memory_space<vmem>>) attributes {dimension_semantics = [#tpu.dimension_semantics<parallel>], iteration_bounds = array<i64: 2>, scalar_prefetch = 0 : i64, scratch_operands = 0 : i64, tpu.core_type = #tpu.core_type<tc>, window_params = [{transform_indices = @transform_0, window_bounds = array<i64: 8, 8>}, {pipeline_mode = #tpu.pipeline_mode<synchronous>, transform_indices = @transform_1, window_bounds = array<i64: 128, 128>}, {pipeline_mode = #tpu.pipeline_mode<synchronous>, transform_indices = @transform_2, window_bounds = array<i64: 128, 128>}, {pipeline_mode = #tpu.pipeline_mode<synchronous>, transform_indices = @transform_3, window_bounds = array<i64: 1, 128>}, {transform_indices = @transform_4, window_bounds = array<i64: 8, 128>}]} {
    %c0 = arith.constant 0 : index
    %c0_0 = arith.constant 0 : index
    %0 = vector.load %arg1[%c0, %c0_0] : memref<8x8xi32, #tpu.memory_space<vmem>>, vector<8x8xi32>
    %c0_i32 = arith.constant 0 : i32
    %1 = vector.broadcast %c0_i32 : i32 to vector<8x8xi32>
    %2 = arith.cmpi ne, %0, %1 : vector<8x8xi32>
    %3 = arith.extui %2 : vector<8x8xi1> to vector<8x8xi32>
    %4 = arith.sitofp %3 : vector<8x8xi32> to vector<8x8xf32>
    %cst = arith.constant dense<0.000000e+00> : vector<8xf32>
    %5 = vector.multi_reduction <add>, %4, %cst [1] : vector<8x8xf32> to vector<8xf32>
    %6 = vector.shape_cast %5 : vector<8xf32> to vector<8x1xf32>
    %cst_1 = arith.constant 1.000000e+00 : f32
    %7 = vector.broadcast %cst_1 : f32 to vector<8x1xf32>
    %8 = arith.maximumf %6, %7 : vector<8x1xf32>
    %9 = tpu.iota {dimensions = array<i32: 1>} : vector<8x128xi32>
    %c0_i32_2 = arith.constant 0 : i32
    %10 = vector.broadcast %c0_i32_2 : i32 to vector<8x128xi32>
    %11 = arith.cmpi sgt, %9, %10 : vector<8x128xi32>
    %cst_3 = arith.constant 0.000000e+00 : f32
    %12 = vector.broadcast %cst_3 : f32 to vector<8x128xf32>
    %13 = vector.extract_strided_slice %0 {offsets = [0, 0], sizes = [8, 1], strides = [1, 1]} : vector<8x8xi32> to vector<8x1xi32>
    %14 = vector.broadcast %13 : vector<8x1xi32> to vector<8x128xi32>
    %15 = arith.cmpi eq, %9, %14 : vector<8x128xi32>
    %16 = arith.andi %15, %11 : vector<8x128xi1>
    %17 = arith.extui %16 : vector<8x128xi1> to vector<8x128xi32>
    %18 = arith.sitofp %17 : vector<8x128xi32> to vector<8x128xf32>
    %19 = arith.addf %12, %18 : vector<8x128xf32>
    %20 = vector.extract_strided_slice %0 {offsets = [0, 1], sizes = [8, 1], strides = [1, 1]} : vector<8x8xi32> to vector<8x1xi32>
    %21 = vector.broadcast %20 : vector<8x1xi32> to vector<8x128xi32>
    %22 = arith.cmpi eq, %9, %21 : vector<8x128xi32>
    %23 = arith.andi %22, %11 : vector<8x128xi1>
    %24 = arith.extui %23 : vector<8x128xi1> to vector<8x128xi32>
    %25 = arith.sitofp %24 : vector<8x128xi32> to vector<8x128xf32>
    %26 = arith.addf %19, %25 : vector<8x128xf32>
    %27 = vector.extract_strided_slice %0 {offsets = [0, 2], sizes = [8, 1], strides = [1, 1]} : vector<8x8xi32> to vector<8x1xi32>
    %28 = vector.broadcast %27 : vector<8x1xi32> to vector<8x128xi32>
    %29 = arith.cmpi eq, %9, %28 : vector<8x128xi32>
    %30 = arith.andi %29, %11 : vector<8x128xi1>
    %31 = arith.extui %30 : vector<8x128xi1> to vector<8x128xi32>
    %32 = arith.sitofp %31 : vector<8x128xi32> to vector<8x128xf32>
    %33 = arith.addf %26, %32 : vector<8x128xf32>
    %34 = vector.extract_strided_slice %0 {offsets = [0, 3], sizes = [8, 1], strides = [1, 1]} : vector<8x8xi32> to vector<8x1xi32>
    %35 = vector.broadcast %34 : vector<8x1xi32> to vector<8x128xi32>
    %36 = arith.cmpi eq, %9, %35 : vector<8x128xi32>
    %37 = arith.andi %36, %11 : vector<8x128xi1>
    %38 = arith.extui %37 : vector<8x128xi1> to vector<8x128xi32>
    %39 = arith.sitofp %38 : vector<8x128xi32> to vector<8x128xf32>
    %40 = arith.addf %33, %39 : vector<8x128xf32>
    %41 = vector.extract_strided_slice %0 {offsets = [0, 4], sizes = [8, 1], strides = [1, 1]} : vector<8x8xi32> to vector<8x1xi32>
    %42 = vector.broadcast %41 : vector<8x1xi32> to vector<8x128xi32>
    %43 = arith.cmpi eq, %9, %42 : vector<8x128xi32>
    %44 = arith.andi %43, %11 : vector<8x128xi1>
    %45 = arith.extui %44 : vector<8x128xi1> to vector<8x128xi32>
    %46 = arith.sitofp %45 : vector<8x128xi32> to vector<8x128xf32>
    %47 = arith.addf %40, %46 : vector<8x128xf32>
    %48 = vector.extract_strided_slice %0 {offsets = [0, 5], sizes = [8, 1], strides = [1, 1]} : vector<8x8xi32> to vector<8x1xi32>
    %49 = vector.broadcast %48 : vector<8x1xi32> to vector<8x128xi32>
    %50 = arith.cmpi eq, %9, %49 : vector<8x128xi32>
    %51 = arith.andi %50, %11 : vector<8x128xi1>
    %52 = arith.extui %51 : vector<8x128xi1> to vector<8x128xi32>
    %53 = arith.sitofp %52 : vector<8x128xi32> to vector<8x128xf32>
    %54 = arith.addf %47, %53 : vector<8x128xf32>
    %55 = vector.extract_strided_slice %0 {offsets = [0, 6], sizes = [8, 1], strides = [1, 1]} : vector<8x8xi32> to vector<8x1xi32>
    %56 = vector.broadcast %55 : vector<8x1xi32> to vector<8x128xi32>
    %57 = arith.cmpi eq, %9, %56 : vector<8x128xi32>
    %58 = arith.andi %57, %11 : vector<8x128xi1>
    %59 = arith.extui %58 : vector<8x128xi1> to vector<8x128xi32>
    %60 = arith.sitofp %59 : vector<8x128xi32> to vector<8x128xf32>
    %61 = arith.addf %54, %60 : vector<8x128xf32>
    %62 = vector.extract_strided_slice %0 {offsets = [0, 7], sizes = [8, 1], strides = [1, 1]} : vector<8x8xi32> to vector<8x1xi32>
    %63 = vector.broadcast %62 : vector<8x1xi32> to vector<8x128xi32>
    %64 = arith.cmpi eq, %9, %63 : vector<8x128xi32>
    %65 = arith.andi %64, %11 : vector<8x128xi1>
    %66 = arith.extui %65 : vector<8x128xi1> to vector<8x128xi32>
    %67 = arith.sitofp %66 : vector<8x128xi32> to vector<8x128xf32>
    %68 = arith.addf %61, %67 : vector<8x128xf32>
    %69 = arith.truncf %68 : vector<8x128xf32> to vector<8x128xbf16>
    %c0_4 = arith.constant 0 : index
    %c0_5 = arith.constant 0 : index
    %70 = vector.load %arg2[%c0_4, %c0_5] : memref<128x128xbf16, #tpu.memory_space<vmem>>, vector<128x128xbf16>
    %cst_6 = arith.constant dense<0.000000e+00> : vector<8x128xf32>
    %71 = tpu.matmul %69, %70, %cst_6 {dimension_numbers = #tpu.dot_dimension_numbers<[1], [0], [0], [1], [0, 0, 1, 1], [], []>} : vector<8x128xbf16>, vector<128x128xbf16>, vector<8x128xf32> -> vector<8x128xf32>
    %72 = vector.broadcast %8 : vector<8x1xf32> to vector<8x128xf32>
    %73 = arith.divf %71, %72 : vector<8x128xf32>
    %74 = arith.truncf %73 : vector<8x128xf32> to vector<8x128xbf16>
    %c0_7 = arith.constant 0 : index
    %c0_8 = arith.constant 0 : index
    %75 = vector.load %arg3[%c0_7, %c0_8] : memref<128x128xbf16, #tpu.memory_space<vmem>>, vector<128x128xbf16>
    %cst_9 = arith.constant dense<0.000000e+00> : vector<8x128xf32>
    %76 = tpu.matmul %74, %75, %cst_9 {dimension_numbers = #tpu.dot_dimension_numbers<[1], [0], [0], [1], [0, 0, 1, 1], [], []>} : vector<8x128xbf16>, vector<128x128xbf16>, vector<8x128xf32> -> vector<8x128xf32>
    %c0_10 = arith.constant 0 : index
    %c0_11 = arith.constant 0 : index
    %77 = vector.load %arg4[%c0_10, %c0_11] : memref<1x128xf32, #tpu.memory_space<vmem>>, vector<1x128xf32>
    %78 = vector.broadcast %77 : vector<1x128xf32> to vector<8x128xf32>
    %79 = arith.addf %76, %78 : vector<8x128xf32>
    %cst_12 = arith.constant 0.000000e+00 : f32
    %80 = vector.broadcast %cst_12 : f32 to vector<8x128xf32>
    %81 = arith.maximumf %79, %80 : vector<8x128xf32>
    %c0_13 = arith.constant 0 : index
    %c0_14 = arith.constant 0 : index
    %82 = vector.load %arg5[%c0_13, %c0_14] : memref<8x128xf32, #tpu.memory_space<vmem>>, vector<8x128xf32>
    tpu.vector_store %arg5[%c0_13, %c0_14], %81 {strides = array<i32>} : memref<8x128xf32, #tpu.memory_space<vmem>>, vector<8x128xf32>,
    return
  }
  func.func @transform_0(%arg0: i32) -> (i32, i32) {
    %c0_i32 = arith.constant 0 : i32
    %c0_i32_0 = arith.constant 0 : i32
    return %arg0, %c0_i32 : i32, i32
  }
  func.func @transform_1(%arg0: i32) -> (i32, i32) {
    %c0_i32 = arith.constant 0 : i32
    %c0_i32_0 = arith.constant 0 : i32
    %c0_i32_1 = arith.constant 0 : i32
    return %c0_i32, %c0_i32_0 : i32, i32
  }
  func.func @transform_2(%arg0: i32) -> (i32, i32) {
    %c0_i32 = arith.constant 0 : i32
    %c0_i32_0 = arith.constant 0 : i32
    %c0_i32_1 = arith.constant 0 : i32
    return %c0_i32, %c0_i32_0 : i32, i32
  }
  func.func @transform_3(%arg0: i32) -> (i32, i32) {
    %c0_i32 = arith.constant 0 : i32
    %c0_i32_0 = arith.constant 0 : i32
    %c0_i32_1 = arith.constant 0 : i32
    return %c0_i32, %c0_i32_0 : i32, i32
  }
  func.func @transform_4(%arg0: i32) -> (i32, i32) {
    %c0_i32 = arith.constant 0 : i32
    %c0_i32_0 = arith.constant 0 : i32
    return %arg0, %c0_i32 : i32, i32
  }
}

module attributes {stable_mosaic.version = 11 : i64} {
  func.func @text_encoder_kernel(%arg0: i32, %arg1: memref<8x8xi32, #tpu.memory_space<vmem>>, %arg2: memref<128x128xbf16, #tpu.memory_space<vmem>>, %arg3: memref<128x128xbf16, #tpu.memory_space<vmem>>, %arg4: memref<1x128xf32, #tpu.memory_space<vmem>>, %arg5: memref<8x128xf32, #tpu.memory_space<vmem>>) attributes {dimension_semantics = [#tpu.dimension_semantics<parallel>], iteration_bounds = array<i64: 2>, scalar_prefetch = 0 : i64, scratch_operands = 0 : i64, tpu.core_type = #tpu.core_type<tc>, window_params = [{transform_indices = @transform_0, window_bounds = array<i64: 8, 8>}, {pipeline_mode = #tpu.pipeline_mode<synchronous>, transform_indices = @transform_1, window_bounds = array<i64: 128, 128>}, {pipeline_mode = #tpu.pipeline_mode<synchronous>, transform_indices = @transform_2, window_bounds = array<i64: 128, 128>}, {pipeline_mode = #tpu.pipeline_mode<synchronous>, transform_indices = @transform_3, window_bounds = array<i64: 1, 128>}, {transform_indices = @transform_4, window_bounds = array<i64: 8, 128>}]} {
    %c0 = arith.constant 0 : index
    %c0_0 = arith.constant 0 : index
    %0 = vector.load %arg1[%c0, %c0_0] : memref<8x8xi32, #tpu.memory_space<vmem>>, vector<8x8xi32>
    %c0_i32 = arith.constant 0 : i32
    %1 = vector.broadcast %c0_i32 : i32 to vector<8x8xi32>
    %2 = arith.cmpi ne, %0, %1 : vector<8x8xi32>
    %3 = arith.extui %2 : vector<8x8xi1> to vector<8x8xi32>
    %4 = arith.sitofp %3 : vector<8x8xi32> to vector<8x8xf32>
    %cst = arith.constant dense<0.000000e+00> : vector<8xf32>
    %5 = vector.multi_reduction <add>, %4, %cst [1] : vector<8x8xf32> to vector<8xf32>
    %6 = vector.shape_cast %5 : vector<8xf32> to vector<8x1xf32>
    %cst_1 = arith.constant 1.000000e+00 : f32
    %7 = vector.broadcast %cst_1 : f32 to vector<8x1xf32>
    %8 = arith.maximumf %6, %7 : vector<8x1xf32>
    %9 = tpu.iota {dimensions = array<i32: 1>} : vector<8x128xi32>
    %c0_i32_2 = arith.constant 0 : i32
    %10 = vector.broadcast %c0_i32_2 : i32 to vector<8x128xi32>
    %11 = arith.cmpi sgt, %9, %10 : vector<8x128xi32>
    %cst_3 = arith.constant 0.000000e+00 : f32
    %12 = vector.broadcast %cst_3 : f32 to vector<8x128xf32>
    %13 = vector.extract_strided_slice %0 {offsets = [0, 0], sizes = [8, 1], strides = [1, 1]} : vector<8x8xi32> to vector<8x1xi32>
    %14 = vector.broadcast %13 : vector<8x1xi32> to vector<8x128xi32>
    %15 = arith.cmpi eq, %9, %14 : vector<8x128xi32>
    %16 = arith.andi %15, %11 : vector<8x128xi1>
    %17 = arith.extui %16 : vector<8x128xi1> to vector<8x128xi32>
    %18 = arith.sitofp %17 : vector<8x128xi32> to vector<8x128xf32>
    %19 = arith.addf %12, %18 : vector<8x128xf32>
    %20 = vector.extract_strided_slice %0 {offsets = [0, 1], sizes = [8, 1], strides = [1, 1]} : vector<8x8xi32> to vector<8x1xi32>
    %21 = vector.broadcast %20 : vector<8x1xi32> to vector<8x128xi32>
    %22 = arith.cmpi eq, %9, %21 : vector<8x128xi32>
    %23 = arith.andi %22, %11 : vector<8x128xi1>
    %24 = arith.extui %23 : vector<8x128xi1> to vector<8x128xi32>
    %25 = arith.sitofp %24 : vector<8x128xi32> to vector<8x128xf32>
    %26 = arith.addf %19, %25 : vector<8x128xf32>
    %27 = vector.extract_strided_slice %0 {offsets = [0, 2], sizes = [8, 1], strides = [1, 1]} : vector<8x8xi32> to vector<8x1xi32>
    %28 = vector.broadcast %27 : vector<8x1xi32> to vector<8x128xi32>
    %29 = arith.cmpi eq, %9, %28 : vector<8x128xi32>
    %30 = arith.andi %29, %11 : vector<8x128xi1>
    %31 = arith.extui %30 : vector<8x128xi1> to vector<8x128xi32>
    %32 = arith.sitofp %31 : vector<8x128xi32> to vector<8x128xf32>
    %33 = arith.addf %26, %32 : vector<8x128xf32>
    %34 = vector.extract_strided_slice %0 {offsets = [0, 3], sizes = [8, 1], strides = [1, 1]} : vector<8x8xi32> to vector<8x1xi32>
    %35 = vector.broadcast %34 : vector<8x1xi32> to vector<8x128xi32>
    %36 = arith.cmpi eq, %9, %35 : vector<8x128xi32>
    %37 = arith.andi %36, %11 : vector<8x128xi1>
    %38 = arith.extui %37 : vector<8x128xi1> to vector<8x128xi32>
    %39 = arith.sitofp %38 : vector<8x128xi32> to vector<8x128xf32>
    %40 = arith.addf %33, %39 : vector<8x128xf32>
    %41 = vector.extract_strided_slice %0 {offsets = [0, 4], sizes = [8, 1], strides = [1, 1]} : vector<8x8xi32> to vector<8x1xi32>
    %42 = vector.broadcast %41 : vector<8x1xi32> to vector<8x128xi32>
    %43 = arith.cmpi eq, %9, %42 : vector<8x128xi32>
    %44 = arith.andi %43, %11 : vector<8x128xi1>
    %45 = arith.extui %44 : vector<8x128xi1> to vector<8x128xi32>
    %46 = arith.sitofp %45 : vector<8x128xi32> to vector<8x128xf32>
    %47 = arith.addf %40, %46 : vector<8x128xf32>
    %48 = vector.extract_strided_slice %0 {offsets = [0, 5], sizes = [8, 1], strides = [1, 1]} : vector<8x8xi32> to vector<8x1xi32>
    %49 = vector.broadcast %48 : vector<8x1xi32> to vector<8x128xi32>
    %50 = arith.cmpi eq, %9, %49 : vector<8x128xi32>
    %51 = arith.andi %50, %11 : vector<8x128xi1>
    %52 = arith.extui %51 : vector<8x128xi1> to vector<8x128xi32>
    %53 = arith.sitofp %52 : vector<8x128xi32> to vector<8x128xf32>
    %54 = arith.addf %47, %53 : vector<8x128xf32>
    %55 = vector.extract_strided_slice %0 {offsets = [0, 6], sizes = [8, 1], strides = [1, 1]} : vector<8x8xi32> to vector<8x1xi32>
    %56 = vector.broadcast %55 : vector<8x1xi32> to vector<8x128xi32>
    %57 = arith.cmpi eq, %9, %56 : vector<8x128xi32>
    %58 = arith.andi %57, %11 : vector<8x128xi1>
    %59 = arith.extui %58 : vector<8x128xi1> to vector<8x128xi32>
    %60 = arith.sitofp %59 : vector<8x128xi32> to vector<8x128xf32>
    %61 = arith.addf %54, %60 : vector<8x128xf32>
    %62 = vector.extract_strided_slice %0 {offsets = [0, 7], sizes = [8, 1], strides = [1, 1]} : vector<8x8xi32> to vector<8x1xi32>
    %63 = vector.broadcast %62 : vector<8x1xi32> to vector<8x128xi32>
    %64 = arith.cmpi eq, %9, %63 : vector<8x128xi32>
    %65 = arith.andi %64, %11 : vector<8x128xi1>
    %66 = arith.extui %65 : vector<8x128xi1> to vector<8x128xi32>
    %67 = arith.sitofp %66 : vector<8x128xi32> to vector<8x128xf32>
    %68 = arith.addf %61, %67 : vector<8x128xf32>
    %69 = arith.truncf %68 : vector<8x128xf32> to vector<8x128xbf16>
    %c0_4 = arith.constant 0 : index
    %c0_5 = arith.constant 0 : index
    %70 = vector.load %arg2[%c0_4, %c0_5] : memref<128x128xbf16, #tpu.memory_space<vmem>>, vector<128x128xbf16>
    %cst_6 = arith.constant dense<0.000000e+00> : vector<8x128xf32>
    %71 = tpu.matmul %69, %70, %cst_6 {dimension_numbers = #tpu.dot_dimension_numbers<[1], [0], [0], [1], [0, 0, 1, 1], [], []>} : vector<8x128xbf16>, vector<128x128xbf16>, vector<8x128xf32> -> vector<8x128xf32>
    %72 = vector.broadcast %8 : vector<8x1xf32> to vector<8x128xf32>
    %73 = arith.divf %71, %72 : vector<8x128xf32>
    %74 = arith.truncf %73 : vector<8x128xf32> to vector<8x128xbf16>
    %c0_7 = arith.constant 0 : index
    %c0_8 = arith.constant 0 : index
    %75 = vector.load %arg3[%c0_7, %c0_8] : memref<128x128xbf16, #tpu.memory_space<vmem>>, vector<128x128xbf16>
    %cst_9 = arith.constant dense<0.000000e+00> : vector<8x128xf32>
    %76 = tpu.matmul %74, %75, %cst_9 {dimension_numbers = #tpu.dot_dimension_numbers<[1], [0], [0], [1], [0, 0, 1, 1], [], []>} : vector<8x128xbf16>, vector<128x128xbf16>, vector<8x128xf32> -> vector<8x128xf32>
    %c0_10 = arith.constant 0 : index
    %c0_11 = arith.constant 0 : index
    %77 = vector.load %arg4[%c0_10, %c0_11] : memref<1x128xf32, #tpu.memory_space<vmem>>, vector<1x128xf32>
    %78 = vector.broadcast %77 : vector<1x128xf32> to vector<8x128xf32>
    %79 = arith.addf %76, %78 : vector<8x128xf32>
    %cst_12 = arith.constant 0.000000e+00 : f32
    %80 = vector.broadcast %cst_12 : f32 to vector<8x128xf32>
    %81 = arith.maximumf %79, %80 : vector<8x128xf32>
    %c0_13 = arith.constant 0 : index
    %c0_14 = arith.constant 0 : index
    %82 = vector.load %arg5[%c0_13, %c0_14] : memref<8x128xf32, #tpu.memory_space<vmem>>, vector<8x128xf32>
    tpu.vector_store %arg5[%c0_13, %c0_14], %81 {strides = array<i32>} : memref<8x128xf32, #tpu.memory_space<vmem>>, vector<8x128xf32>,
    return
  }
  func.func @transform_0(%arg0: i32) -> (i32, i32) {
    %c0_i32 = arith.constant 0 : i32
    %c0_i32_0 = arith.constant 0 : i32
    return %arg0, %c0_i32 : i32, i32
  }
  func.func @transform_1(%arg0: i32) -> (i32, i32) {
    %c0_i32 = arith.constant 0 : i32
    %c0_i32_0 = arith.constant 0 : i32
    %c0_i32_1 = arith.constant 0 : i32
    return %c0_i32, %c0_i32_0 : i32, i32
  }
  func.func @transform_2(%arg0: i32) -> (i32, i32) {
    %c0_i32 = arith.constant 0 : i32
    %c0_i32_0 = arith.constant 0 : i32
    %c0_i32_1 = arith.constant 0 : i32
    return %c0_i32, %c0_i32_0 : i32, i32
  }
  func.func @transform_3(%arg0: i32) -> (i32, i32) {
    %c0_i32 = arith.constant 0 : i32
    %c0_i32_0 = arith.constant 0 : i32
    %c0_i32_1 = arith.constant 0 : i32
    return %c0_i32, %c0_i32_0 : i32, i32
  }
  func.func @transform_4(%arg0: i32) -> (i32, i32) {
    %c0_i32 = arith.constant 0 : i32
    %c0_i32_0 = arith.constant 0 : i32
    return %arg0, %c0_i32 : i32, i32
  }
}

</mosaic_0001>

<llo_original>
// kernel: tpu_custom_call.1
$region0: #{tpu_custom_call.1}
  #allocation0 [shape = 'u32[]', space=smem, size = 0x4, offset = 0x4, fixed_abs, tag = 'smem constant byte address 0x4 - core index']
  #allocation1 [shape = 'u32[144,128]{1,0:T(1,128)}', space=vmem, size = 0x12000, scoped, tag = 'internal scratch']
  %s0 = inlined_call_operand.vmem [shape: s32[16,8], index: 0, kind: input, shape index: {}]
  %s1 = inlined_call_operand.hbm [shape: bf16[128,128], index: 1, kind: input, shape index: {}]
  %s2 = inlined_call_operand.hbm [shape: bf16[128,128], index: 2, kind: input, shape index: {}]
  %s3 = inlined_call_operand.vmem [shape: f32[1,128], index: 3, kind: input, shape index: {}]
  %s4 = inlined_call_operand.hbm [shape: f32[16,128], index: 4, kind: output, shape index: {}]
  %s5 = sld [smem:[#allocation0]]
  $region57: #{tpu_custom_call.1} parent=0
    _
  %s7 = ssub.s32 1, %s5
  %s8 = scalar_select 0, %s7, %s5
  $region1: #{tpu_custom_call.1} parent=0
    #allocation2 [shape = 'u8[32768]{0}', space=vmem, size = 0x8000, scoped, tag = 'input window, operand 1, single buffered']
    #allocation3 [shape = 's32[2]{0}', space=sflag, size = 0x8, scoped, tag = 'scoped memory for tpu_custom_call.1']
    #allocation4 [shape = 's32[2]{0}', space=sflag, size = 0x8, scoped, tag = 'scoped memory for tpu_custom_call.1']
    #allocation5 [shape = 'u8[32768]{0}', space=vmem, size = 0x8000, scoped, tag = 'input window, operand 2, single buffered']
    #allocation6 [shape = 's32[1]{0}', space=sflag, size = 0x4, scoped, tag = 'scoped memory for tpu_custom_call.1']
    #allocation7 [shape = 'u8[8192]{0}', space=vmem, size = 0x2000, scoped, tag = 'output window, operand 0']
    %9 = vsyncpa [#allocation3], 0
    %10 = vsyncpa [#allocation6], 0
    %11 = vsyncpa [#allocation4], 0
    %s12 = scalar_lea.sflag [#allocation4], 1
    %13 = vsyncpa %s12, 0
    loop: start=0, step=1, limit=4
    $region2: #{tpu_custom_call.1} parent=1 // loop_pre_header
      _
    $region3: #{tpu_custom_call.1} parent=1 // loop_header
      %s15 = sphi 0, %s19
      %p16 = scmp.ge.s32.totalorder %s15, 4
      %s25 = sphi 0, %s27
      %s28 = sphi 0, %s25
      %s29 = sphi 0, %s28
      %s45 = sphi 0, %s29
      %s49 = sphi 0, %s49
      %s51 = sphi 0, %s49
      %s52 = sphi 0, %s51
      %s66 = sphi 0, %s52
      %s70 = sphi 0, %s70
      %s72 = sphi 0, %s70
      %s73 = sphi 0, %s72
      %s87 = sphi 0, %s73
      %s91 = sphi 0, %s91
      %s93 = sphi 0, %s91
      %s94 = sphi 0, %s93
      %s108 = sphi 0, %s94
      %s114 = sphi 0, %s116
      %s117 = sphi 0, %s114
      %s118 = sphi 0, %s117
      %s134 = sphi 0, %s118
    $region4: #{tpu_custom_call.1} parent=1 // loop_header_branch
      %18 = sbr.rel (%p16) target = $region8
    $region5: #{tpu_custom_call.1} parent=1 // loop_body
      %s20 = ssub.s32 %s15, 1
      %s21 = ssub.s32 %s15, 2
      %s22 = sadd.s32 %s15, 1
      %s23 = ssub.s32 %s15, %s22
      %p24 = scmp.eq.s32.totalorder %s23, 0
      %s26 = sadd.s32 %s25, 1
      %s27 = scalar_select %p24, %s25, %s26
      %p30 = pneg %p24
      %p31 = scmp.eq.s32.totalorder %s15, 1
      %p32 = por %p30, %p31
      %p33 = scmp.ne.s32.totalorder %s25, %s28
      %p34 = scmp.eq.s32.totalorder %s15, 0
      %p35 = por %p33, %p34
      %p36 = scmp.ne.s32.totalorder %s25, %s28
      %p37 = scmp.eq.s32.totalorder %s20, 1
      %p38 = por %p36, %p37
      %p39 = scmp.ne.s32.totalorder %s28, %s29
      %p40 = scmp.eq.s32.totalorder %s20, 0
      %p41 = por %p39, %p40
      %p42 = scmp.ne.s32.totalorder %s28, %s29
      %p43 = scmp.eq.s32.totalorder %s21, 1
      %p44 = por %p42, %p43
      %p46 = scmp.ne.s32.totalorder %s29, %s45
      %p47 = scmp.eq.s32.totalorder %s21, 0
      %p48 = por %p46, %p47
      %s50 = sadd.s32 %s49, 1
      %p53 = scmp.eq.s32.totalorder %s15, 1
      %p54 = scmp.ne.s32.totalorder %s49, %s51
      %p55 = scmp.eq.s32.totalorder %s15, 0
      %p56 = por %p54, %p55
      %p57 = scmp.ne.s32.totalorder %s49, %s51
      %p58 = scmp.eq.s32.totalorder %s20, 1
      %p59 = por %p57, %p58
      %p60 = scmp.ne.s32.totalorder %s51, %s52
      %p61 = scmp.eq.s32.totalorder %s20, 0
      %p62 = por %p60, %p61
      %p63 = scmp.ne.s32.totalorder %s51, %s52
      %p64 = scmp.eq.s32.totalorder %s21, 1
      %p65 = por %p63, %p64
      %p67 = scmp.ne.s32.totalorder %s52, %s66
      %p68 = scmp.eq.s32.totalorder %s21, 0
      %p69 = por %p67, %p68
      %s71 = sadd.s32 %s70, 1
      %p74 = scmp.eq.s32.totalorder %s15, 1
      %p75 = scmp.ne.s32.totalorder %s70, %s72
      %p76 = scmp.eq.s32.totalorder %s15, 0
      %p77 = por %p75, %p76
      %p78 = scmp.ne.s32.totalorder %s70, %s72
      %p79 = scmp.eq.s32.totalorder %s20, 1
      %p80 = por %p78, %p79
      %p81 = scmp.ne.s32.totalorder %s72, %s73
      %p82 = scmp.eq.s32.totalorder %s20, 0
      %p83 = por %p81, %p82
      %p84 = scmp.ne.s32.totalorder %s72, %s73
      %p85 = scmp.eq.s32.totalorder %s21, 1
      %p86 = por %p84, %p85
      %p88 = scmp.ne.s32.totalorder %s73, %s87
      %p89 = scmp.eq.s32.totalorder %s21, 0
      %p90 = por %p88, %p89
      %s92 = sadd.s32 %s91, 1
      %p95 = scmp.eq.s32.totalorder %s15, 1
      %p96 = scmp.ne.s32.totalorder %s91, %s93
      %p97 = scmp.eq.s32.totalorder %s15, 0
      %p98 = por %p96, %p97
      %p99 = scmp.ne.s32.totalorder %s91, %s93
      %p100 = scmp.eq.s32.totalorder %s20, 1
      %p101 = por %p99, %p100
      %p102 = scmp.ne.s32.totalorder %s93, %s94
      %p103 = scmp.eq.s32.totalorder %s20, 0
      %p104 = por %p102, %p103
      %p105 = scmp.ne.s32.totalorder %s93, %s94
      %p106 = scmp.eq.s32.totalorder %s21, 1
      %p107 = por %p105, %p106
      %p109 = scmp.ne.s32.totalorder %s94, %s108
      %p110 = scmp.eq.s32.totalorder %s21, 0
      %p111 = por %p109, %p110
      %s112 = ssub.s32 %s15, %s22
      %p113 = scmp.eq.s32.totalorder %s112, 0
      %s115 = sadd.s32 %s114, 1
      %s116 = scalar_select %p113, %s114, %s115
      %p119 = pneg %p113
      %p120 = scmp.eq.s32.totalorder %s15, 1
      %p121 = por %p119, %p120
      %p122 = scmp.ne.s32.totalorder %s114, %s117
      %p123 = scmp.eq.s32.totalorder %s15, 0
      %p124 = por %p122, %p123
      %p125 = scmp.ne.s32.totalorder %s114, %s117
      %p126 = scmp.eq.s32.totalorder %s20, 1
      %p127 = por %p125, %p126
      %p128 = scmp.ne.s32.totalorder %s117, %s118
      %p129 = scmp.eq.s32.totalorder %s20, 0
      %p130 = por %p128, %p129
      %p131 = scmp.ne.s32.totalorder %s117, %s118
      %p132 = scmp.eq.s32.totalorder %s21, 1
      %p133 = por %p131, %p132
      %p135 = scmp.ne.s32.totalorder %s118, %s134
      %p136 = scmp.eq.s32.totalorder %s21, 0
      %p137 = por %p135, %p136
      %p138 = scmp.le.s32.totalorder 1, %s15
      %p139 = scmp.lt.s32.totalorder %s15, 3
      %p140 = pnand %p138, %p139
      %p141 = pneg %p140
      // Predicated region
      $region9: #{tpu_custom_call.1} parent=5 // pred_check
        _
      $region10: #{tpu_custom_call.1} parent=5 // pred_check_branch
        %143 = sbr.rel (%p140) target = $region12
      $region11: #{tpu_custom_call.1} parent=5 // pred_region
        %s144 = ssub.s32 %s15, 1
        // Predicated region
        $region13: #{tpu_custom_call.1} parent=11 // pred_check
          %p145 = pneg %p62
        $region14: #{tpu_custom_call.1} parent=11 // pred_check_branch
          %147 = sbr.rel (%p145) target = $region16
        $region15: #{tpu_custom_call.1} parent=11 // pred_region
          %s149 = ssub.s32 1024, 1024
          %150 = vsyncadd [#allocation3], %s149
          %s151 = sshll.u32 [#allocation2], 4
          %s152 = int_to_ptr.vmem [resolvable:$true] %s151
          %157 = dma.hbm_to_vmem [thread:$0]  %s1, 1024, %s152, [#allocation3], 64, 64, 4
        $region16: #{tpu_custom_call.1} parent=11 // pred_fallthru
          _
        // Predicated region
        $region17: #{tpu_custom_call.1} parent=11 // pred_check
          %p158 = pneg %p83
        $region18: #{tpu_custom_call.1} parent=11 // pred_check_branch
          %160 = sbr.rel (%p158) target = $region20
        $region19: #{tpu_custom_call.1} parent=11 // pred_region
          %s162 = ssub.s32 1024, 1024
          %163 = vsyncadd [#allocation6], %s162
          %s164 = sshll.u32 [#allocation5], 4
          %s165 = int_to_ptr.vmem [resolvable:$true] %s164
          %170 = dma.hbm_to_vmem [thread:$0]  %s2, 1024, %s165, [#allocation6], 64, 64, 4
        $region20: #{tpu_custom_call.1} parent=11 // pred_fallthru
          _
        // Predicated region
        $region21: #{tpu_custom_call.1} parent=11 // pred_check
          %p171 = pneg %p104
        $region22: #{tpu_custom_call.1} parent=11 // pred_check_branch
          %173 = sbr.rel (%p171) target = $region24
        $region23: #{tpu_custom_call.1} parent=11 // pred_region
          _
        $region24: #{tpu_custom_call.1} parent=11 // pred_fallthru
          _
      $region12: #{tpu_custom_call.1} parent=5 // pred_fallthru
        _
      %p174 = scmp.lt.s32.totalorder %s15, 2
      // Predicated region
      $region25: #{tpu_custom_call.1} parent=5 // pred_check
        %p175 = pneg %p174
      $region26: #{tpu_custom_call.1} parent=5 // pred_check_branch
        %177 = sbr.rel (%p175) target = $region28
      $region27: #{tpu_custom_call.1} parent=5 // pred_region
        // Predicated region
        $region29: #{tpu_custom_call.1} parent=27 // pred_check
          %p178 = pneg %p35
        $region30: #{tpu_custom_call.1} parent=27 // pred_check_branch
          %180 = sbr.rel (%p178) target = $region32
        $region31: #{tpu_custom_call.1} parent=27 // pred_region
          %p181 = scmp.lt.s32.totalorder %s15, 1
          %s182 = scalar_select %p181, %s15, 1
          %s183 = smul.addr %s182, 8
          %s184 = scalar_lea.vmem %s0, %s183
        $region32: #{tpu_custom_call.1} parent=27 // pred_fallthru
          _
      $region28: #{tpu_custom_call.1} parent=5 // pred_fallthru
        _
      %p185 = scmp.le.s32.totalorder 1, %s15
      %p186 = scmp.lt.s32.totalorder %s15, 3
      %p187 = pnand %p185, %p186
      %p188 = pneg %p187
      // Predicated region
      $region33: #{tpu_custom_call.1} parent=5 // pred_check
        _
      $region34: #{tpu_custom_call.1} parent=5 // pred_check_branch
        %190 = sbr.rel (%p187) target = $region36
      $region35: #{tpu_custom_call.1} parent=5 // pred_region
        %s191 = ssub.s32 %s15, 1
        // Predicated region
        $region37: #{tpu_custom_call.1} parent=35 // pred_check
          %p192 = pneg %p62
        $region38: #{tpu_custom_call.1} parent=35 // pred_check_branch
          %194 = sbr.rel (%p192) target = $region40
        $region39: #{tpu_custom_call.1} parent=35 // pred_region
          %195 = dma.done [#allocation3], 1024
        $region40: #{tpu_custom_call.1} parent=35 // pred_fallthru
          _
        // Predicated region
        $region41: #{tpu_custom_call.1} parent=35 // pred_check
          %p196 = pneg %p83
        $region42: #{tpu_custom_call.1} parent=35 // pred_check_branch
          %198 = sbr.rel (%p196) target = $region44
        $region43: #{tpu_custom_call.1} parent=35 // pred_region
          %199 = dma.done [#allocation6], 1024
        $region44: #{tpu_custom_call.1} parent=35 // pred_fallthru
          _
        %p200 = scmp.lt.s32.totalorder %s20, 1
        %s201 = scalar_select %p200, %s20, 1
        %s202 = smul.addr %s201, 8
        %s203 = scalar_lea.vmem %s0, %s202
        %p204 = pneg %p41
        %p205 = pneg %p38
        %p206 = pneg %p62
        %p207 = pneg %p59
        %p208 = pneg %p83
        %p209 = pneg %p80
        %p210 = pneg %p104
        %p211 = pneg %p101
        %p212 = pneg %p130
        %p213 = pneg %p127
        %s214 = sand.u32 %s117, 1
        %s215 = scalar_lea.sflag [#allocation4], %s214
        %s216 = sand.u32 %s117, 1
        %s217 = smul.addr %s216, 8
        %s218 = scalar_lea.vmem [#allocation7], %s217
        %p219 = scmp.lt.s32.totalorder %s20, 1
        %s220 = scalar_select %p219, %s20, 1
        %s221 = smul.addr %s220, 8
        %s222 = scalar_lea.vmem %s0, %s221
        %v224 = vld [vmem:[%s222] sm:$0xff]
        %vm225 = vcmp.ne.s32.totalorder %v224, 0
        %v226 = vsel %vm225, 1, 0
        %v227 = vcvt.s32.f32 %v226
        %vm228 = vcmask 64512
        %v229 = vsel %vm228, %v227, 0.0
        %230 = vadd.xlane.f32.xlu0 %v229
        %v231 = vpop.xlane.xlu0 %230
        %v232 = vmax.f32 %v231, 1.0
        %v233 = vlaneseq
        %v234 = vand.u32 %v233, 127
        %vm235 = vcmp.gt.s32.totalorder %v234, 0
        %236 = vset.pattern.permute.xlu0 0
        %237 = vperm.xlu0 %236, %v224
        %v238 = vpop.permute.xlu0 %237
        %vm239 = vcmp.eq.s32.totalorder %v234, %v238
        %vm240 = vmand %vm239, %vm235
        %v241 = vsel %vm240, 1, 0
        %v242 = vcvt.s32.f32 %v241
        %v243 = vadd.f32 %v242, 0.0
        %244 = vset.pattern.permute.xlu0 1
        %245 = vperm.xlu0 %244, %v224
        %v246 = vpop.permute.xlu0 %245
        %vm247 = vcmp.eq.s32.totalorder %v234, %v246
        %vm248 = vmand %vm247, %vm235
        %v249 = vsel %vm248, 1, 0
        %v250 = vcvt.s32.f32 %v249
        %v251 = vadd.f32 %v243, %v250
        %252 = vset.pattern.permute.xlu0 2
        %253 = vperm.xlu0 %252, %v224
        %v254 = vpop.permute.xlu0 %253
        %vm255 = vcmp.eq.s32.totalorder %v234, %v254
        %vm256 = vmand %vm255, %vm235
        %v257 = vsel %vm256, 1, 0
        %v258 = vcvt.s32.f32 %v257
        %v259 = vadd.f32 %v251, %v258
        %260 = vset.pattern.permute.xlu0 3
        %261 = vperm.xlu0 %260, %v224
        %v262 = vpop.permute.xlu0 %261
        %vm263 = vcmp.eq.s32.totalorder %v234, %v262
        %vm264 = vmand %vm263, %vm235
        %v265 = vsel %vm264, 1, 0
        %v266 = vcvt.s32.f32 %v265
        %v267 = vadd.f32 %v259, %v266
        %268 = vset.pattern.permute.xlu0 4
        %269 = vperm.xlu0 %268, %v224
        %v270 = vpop.permute.xlu0 %269
        %vm271 = vcmp.eq.s32.totalorder %v234, %v270
        %vm272 = vmand %vm271, %vm235
        %v273 = vsel %vm272, 1, 0
        %v274 = vcvt.s32.f32 %v273
        %v275 = vadd.f32 %v267, %v274
        %276 = vset.pattern.permute.xlu0 5
        %277 = vperm.xlu0 %276, %v224
        %v278 = vpop.permute.xlu0 %277
        %vm279 = vcmp.eq.s32.totalorder %v234, %v278
        %vm280 = vmand %vm279, %vm235
        %v281 = vsel %vm280, 1, 0
        %v282 = vcvt.s32.f32 %v281
        %v283 = vadd.f32 %v275, %v282
        %284 = vset.pattern.permute.xlu0 6
        %285 = vperm.xlu0 %284, %v224
        %v286 = vpop.permute.xlu0 %285
        %vm287 = vcmp.eq.s32.totalorder %v234, %v286
        %vm288 = vmand %vm287, %vm235
        %v289 = vsel %vm288, 1, 0
        %v290 = vcvt.s32.f32 %v289
        %v291 = vadd.f32 %v283, %v290
        %292 = vset.pattern.permute.xlu0 7
        %293 = vperm.xlu0 %292, %v224
        %v294 = vpop.permute.xlu0 %293
        %vm295 = vcmp.eq.s32.totalorder %v234, %v294
        %vm296 = vmand %vm295, %vm235
        %v297 = vsel %vm296, 1, 0
        %v298 = vcvt.s32.f32 %v297
        %v299 = vadd.f32 %v291, %v298
        %v300 = vpack.c.bf16 %v299, %v299
        %v301 = vld [vmem:[#allocation2] sm:$0xf]
        %v302 = vld [vmem:[#allocation2 + $0x4] sm:$0xf]
        %v303 = vld [vmem:[#allocation2 + $0x8] sm:$0xf]
        %v304 = vld [vmem:[#allocation2 + $0xc] sm:$0xf]
        %v305 = vld [vmem:[#allocation2 + $0x10] sm:$0xf]
        %v306 = vld [vmem:[#allocation2 + $0x14] sm:$0xf]
        %v307 = vld [vmem:[#allocation2 + $0x18] sm:$0xf]
        %v308 = vld [vmem:[#allocation2 + $0x1c] sm:$0xf]
        %v309 = vld [vmem:[#allocation2 + $0x20] sm:$0xf]
        %v310 = vld [vmem:[#allocation2 + $0x24] sm:$0xf]
        %v311 = vld [vmem:[#allocation2 + $0x28] sm:$0xf]
        %v312 = vld [vmem:[#allocation2 + $0x2c] sm:$0xf]
        %v313 = vld [vmem:[#allocation2 + $0x30] sm:$0xf]
        %v314 = vld [vmem:[#allocation2 + $0x34] sm:$0xf]
        %v315 = vld [vmem:[#allocation2 + $0x38] sm:$0xf]
        %v316 = vld [vmem:[#allocation2 + $0x3c] sm:$0xf]
        %v333 = vunpack.c.l.b16 %v301
        %v334 = vunpack.c.l.b16 %v302
        %v335 = vunpack.c.l.b16 %v303
        %v336 = vunpack.c.l.b16 %v304
        %v337 = vunpack.c.l.b16 %v305
        %v338 = vunpack.c.l.b16 %v306
        %v339 = vunpack.c.l.b16 %v307
        %v340 = vunpack.c.l.b16 %v308
        %v341 = vunpack.c.l.b16 %v309
        %v342 = vunpack.c.l.b16 %v310
        %v343 = vunpack.c.l.b16 %v311
        %v344 = vunpack.c.l.b16 %v312
        %v345 = vunpack.c.l.b16 %v313
        %v346 = vunpack.c.l.b16 %v314
        %v347 = vunpack.c.l.b16 %v315
        %v348 = vunpack.c.l.b16 %v316
        %v349 = vpack.c.b16 %v334, %v333
        %v350 = vpack.c.b16 %v336, %v335
        %v351 = vpack.c.b16 %v338, %v337
        %v352 = vpack.c.b16 %v340, %v339
        %v353 = vpack.c.b16 %v342, %v341
        %v354 = vpack.c.b16 %v344, %v343
        %v355 = vpack.c.b16 %v346, %v345
        %v356 = vpack.c.b16 %v348, %v347
        %365 = vmatprep.subr.bf16.mxu0 0
        %366 = vmatpush1.bf16.msra.mxu0 %v349
        %367 = vmatprep.subr.bf16.mxu0 0
        %368 = vmatpush1.bf16.msra.mxu0 %v350
        %369 = vmatprep.subr.bf16.mxu0 0
        %370 = vmatpush1.bf16.msra.mxu0 %v351
        %371 = vmatprep.subr.bf16.mxu0 0
        %372 = vmatpush1.bf16.msra.mxu0 %v352
        %373 = vmatprep.subr.bf16.mxu0 0
        %374 = vmatpush1.bf16.msra.mxu0 %v353
        %375 = vmatprep.subr.bf16.mxu0 0
        %376 = vmatpush1.bf16.msra.mxu0 %v354
        %377 = vmatprep.subr.bf16.mxu0 0
        %378 = vmatpush1.bf16.msra.mxu0 %v355
        %379 = vmatprep.subr.bf16.mxu0 0
        %380 = vmatpush1.bf16.msra.mxu0 %v356
        %381 = vmatprep.subr.bf16.mxu0 0
        %382 = vmatpush1.bf16.msra.mxu0 0
        %383 = vmatprep.subr.bf16.mxu0 0
        %384 = vmatpush1.bf16.msra.mxu0 0
        %385 = vmatprep.subr.bf16.mxu0 0
        %386 = vmatpush1.bf16.msra.mxu0 0
        %387 = vmatprep.subr.bf16.mxu0 0
        %388 = vmatpush1.bf16.msra.mxu0 0
        %389 = vmatprep.subr.bf16.mxu0 0
        %390 = vmatpush1.bf16.msra.mxu0 0
        %391 = vmatprep.subr.bf16.mxu0 0
        %392 = vmatpush1.bf16.msra.mxu0 0
        %393 = vmatprep.subr.bf16.mxu0 0
        %394 = vmatpush1.bf16.msra.mxu0 0
        %395 = vmatprep.subr.bf16.mxu0 0
        %396 = vmatpush1.bf16.msra.mxu0 0
        %397 = vmatprep.mubr.bf16.mxu0 0
        %398 = vmatmul.mubr.bf16.gmra.mrb[0].mxu0 %v300
        %v399 = vpop.f32.mrb[0].mxu0
        %v400 = vadd.f32 0.0, %v399
        %v401 = vpop.f32.mrb[0].mxu0
        %v402 = vpop.f32.mrb[0].mxu0
        %v403 = vpop.f32.mrb[0].mxu0
        %404 = vdwg.mxu0
        %v405 = vrcp.pop %v232
        %v406 = vmul.f32 %v400, %v405
        %v407 = vpack.c.bf16 %v406, %v406
        %v408 = vld [vmem:[#allocation5] sm:$0xf]
        %v409 = vld [vmem:[#allocation5 + $0x4] sm:$0xf]
        %v410 = vld [vmem:[#allocation5 + $0x8] sm:$0xf]
        %v411 = vld [vmem:[#allocation5 + $0xc] sm:$0xf]
        %v412 = vld [vmem:[#allocation5 + $0x10] sm:$0xf]
        %v413 = vld [vmem:[#allocation5 + $0x14] sm:$0xf]
        %v414 = vld [vmem:[#allocation5 + $0x18] sm:$0xf]
        %v415 = vld [vmem:[#allocation5 + $0x1c] sm:$0xf]
        %v416 = vld [vmem:[#allocation5 + $0x20] sm:$0xf]
        %v417 = vld [vmem:[#allocation5 + $0x24] sm:$0xf]
        %v418 = vld [vmem:[#allocation5 + $0x28] sm:$0xf]
        %v419 = vld [vmem:[#allocation5 + $0x2c] sm:$0xf]
        %v420 = vld [vmem:[#allocation5 + $0x30] sm:$0xf]
        %v421 = vld [vmem:[#allocation5 + $0x34] sm:$0xf]
        %v422 = vld [vmem:[#allocation5 + $0x38] sm:$0xf]
        %v423 = vld [vmem:[#allocation5 + $0x3c] sm:$0xf]
        %v424 = vld [vmem:[%s3] sm:$0x1]
        %v426 = vlaneseq
        %v427 = vshrl.u32 %v426, 7
        %v428 = vsub.s32 0, %v427
        %v429 = vrot.slane %v424, %v428
        %v447 = vunpack.c.l.b16 %v408
        %v448 = vunpack.c.l.b16 %v409
        %v449 = vunpack.c.l.b16 %v410
        %v450 = vunpack.c.l.b16 %v411
        %v451 = vunpack.c.l.b16 %v412
        %v452 = vunpack.c.l.b16 %v413
        %v453 = vunpack.c.l.b16 %v414
        %v454 = vunpack.c.l.b16 %v415
        %v455 = vunpack.c.l.b16 %v416
        %v456 = vunpack.c.l.b16 %v417
        %v457 = vunpack.c.l.b16 %v418
        %v458 = vunpack.c.l.b16 %v419
        %v459 = vunpack.c.l.b16 %v420
        %v460 = vunpack.c.l.b16 %v421
        %v461 = vunpack.c.l.b16 %v422
        %v462 = vunpack.c.l.b16 %v423
        %v463 = vpack.c.b16 %v448, %v447
        %v464 = vpack.c.b16 %v450, %v449
        %v465 = vpack.c.b16 %v452, %v451
        %v466 = vpack.c.b16 %v454, %v453
        %v467 = vpack.c.b16 %v456, %v455
        %v468 = vpack.c.b16 %v458, %v457
        %v469 = vpack.c.b16 %v460, %v459
        %v470 = vpack.c.b16 %v462, %v461
        %479 = vmatprep.subr.bf16.mxu0 0
        %480 = vmatpush1.bf16.msra.mxu0 %v463
        %481 = vmatprep.subr.bf16.mxu0 0
        %482 = vmatpush1.bf16.msra.mxu0 %v464
        %483 = vmatprep.subr.bf16.mxu0 0
        %484 = vmatpush1.bf16.msra.mxu0 %v465
        %485 = vmatprep.subr.bf16.mxu0 0
        %486 = vmatpush1.bf16.msra.mxu0 %v466
        %487 = vmatprep.subr.bf16.mxu0 0
        %488 = vmatpush1.bf16.msra.mxu0 %v467
        %489 = vmatprep.subr.bf16.mxu0 0
        %490 = vmatpush1.bf16.msra.mxu0 %v468
        %491 = vmatprep.subr.bf16.mxu0 0
        %492 = vmatpush1.bf16.msra.mxu0 %v469
        %493 = vmatprep.subr.bf16.mxu0 0
        %494 = vmatpush1.bf16.msra.mxu0 %v470
        %495 = vmatprep.subr.bf16.mxu0 0
        %496 = vmatpush1.bf16.msra.mxu0 0
        %497 = vmatprep.subr.bf16.mxu0 0
        %498 = vmatpush1.bf16.msra.mxu0 0
        %499 = vmatprep.subr.bf16.mxu0 0
        %500 = vmatpush1.bf16.msra.mxu0 0
        %501 = vmatprep.subr.bf16.mxu0 0
        %502 = vmatpush1.bf16.msra.mxu0 0
        %503 = vmatprep.subr.bf16.mxu0 0
        %504 = vmatpush1.bf16.msra.mxu0 0
        %505 = vmatprep.subr.bf16.mxu0 0
        %506 = vmatpush1.bf16.msra.mxu0 0
        %507 = vmatprep.subr.bf16.mxu0 0
        %508 = vmatpush1.bf16.msra.mxu0 0
        %509 = vmatprep.subr.bf16.mxu0 0
        %510 = vmatpush1.bf16.msra.mxu0 0
        %511 = vmatprep.mubr.bf16.mxu0 0
        %512 = vmatmul.mubr.bf16.gmra.mrb[0].mxu0 %v407
        %v513 = vpop.f32.mrb[0].mxu0
        %v514 = vadd.f32 %v429, %v513
        %v515 = vpop.f32.mrb[0].mxu0
        %v516 = vpop.f32.mrb[0].mxu0
        %v517 = vpop.f32.mrb[0].mxu0
        %518 = vdwg.mxu0
        %v519 = vmax.f32 %v514, 0.0
        %520 = vst [vmem:[%s218] sm:$0xff] %v519
        %s521 = sand.u32 %s117, 1
        %s522 = scalar_lea.sflag [#allocation4], %s521
        %s523 = sand.u32 %s117, 1
        %s524 = smul.addr %s523, 8
        %s525 = scalar_lea.vmem [#allocation7], %s524
        // Predicated region
        $region45: #{tpu_custom_call.1} parent=35 // pred_check
          %p526 = pneg %p127
        $region46: #{tpu_custom_call.1} parent=35 // pred_check_branch
          %528 = sbr.rel (%p526) target = $region48
        $region47: #{tpu_custom_call.1} parent=35 // pred_region
          %s530 = ssub.s32 128, 128
          %531 = vsyncadd %s522, %s530
          %s532 = smul.addr %s20, 128
          %s533 = scalar_lea.hbm %s4, %s532
          %s535 = sshll.u32 %s525, 4
          %s536 = int_to_ptr.vmem [resolvable:$true] %s535
          %538 = dma.vmem_to_hbm [thread:$0]  %s536, 128, %s533, %s522
        $region48: #{tpu_custom_call.1} parent=35 // pred_fallthru
          _
      $region36: #{tpu_custom_call.1} parent=5 // pred_fallthru
        _
      %p539 = scmp.le.s32.totalorder 2, %s15
      // Predicated region
      $region49: #{tpu_custom_call.1} parent=5 // pred_check
        %p540 = pneg %p539
      $region50: #{tpu_custom_call.1} parent=5 // pred_check_branch
        %542 = sbr.rel (%p540) target = $region52
      $region51: #{tpu_custom_call.1} parent=5 // pred_region
        %s543 = ssub.s32 %s15, 2
        // Predicated region
        $region53: #{tpu_custom_call.1} parent=51 // pred_check
          %p544 = pneg %p133
        $region54: #{tpu_custom_call.1} parent=51 // pred_check_branch
          %546 = sbr.rel (%p544) target = $region56
        $region55: #{tpu_custom_call.1} parent=51 // pred_region
          %s547 = sand.u32 %s118, 1
          %s548 = scalar_lea.sflag [#allocation4], %s547
          %s549 = sand.u32 %s118, 1
          %s550 = smul.addr %s549, 8
          %s551 = scalar_lea.vmem [#allocation7], %s550
          %552 = dma.done %s548, 128
        $region56: #{tpu_custom_call.1} parent=51 // pred_fallthru
          _
      $region52: #{tpu_custom_call.1} parent=5 // pred_fallthru
        _
    $region6: #{tpu_custom_call.1} parent=1 // loop_footer
      %s19 = sadd.s32 1, %s15
    $region7: #{tpu_custom_call.1} parent=1 // loop_footer_branch
      %14 = sbr.rel target = $region3
    $region8: #{tpu_custom_call.1} parent=1 // loop_exit
      _
    %553 = vsyncpa [#allocation3], 1
    %s554 = scalar_lea.sflag [#allocation3], 1
    %555 = vsyncpa %s554, 1
    %556 = vsyncpa [#allocation6], 1
    %557 = vsyncpa [#allocation4], 1
    %s558 = scalar_lea.sflag [#allocation4], 1
    %559 = vsyncpa %s558, 1

// kernel: tpu_custom_call.1
$region0: #{tpu_custom_call.1}
  #allocation0 [shape = 'u32[]', space=smem, size = 0x4, offset = 0x4, fixed_abs, tag = 'smem constant byte address 0x4 - core index']
  #allocation1 [shape = 'u32[144,128]{1,0:T(1,128)}', space=vmem, size = 0x12000, scoped, tag = 'internal scratch']
  %s0 = inlined_call_operand.vmem [shape: s32[16,8], index: 0, kind: input, shape index: {}]
  %s1 = inlined_call_operand.hbm [shape: bf16[128,128], index: 1, kind: input, shape index: {}]
  %s2 = inlined_call_operand.hbm [shape: bf16[128,128], index: 2, kind: input, shape index: {}]
  %s3 = inlined_call_operand.vmem [shape: f32[1,128], index: 3, kind: input, shape index: {}]
  %s4 = inlined_call_operand.hbm [shape: f32[16,128], index: 4, kind: output, shape index: {}]
  %s5 = sld [smem:[#allocation0]]
  $region57: #{tpu_custom_call.1} parent=0
    _
  %s7 = ssub.s32 1, %s5
  %s8 = scalar_select 0, %s7, %s5
  $region1: #{tpu_custom_call.1} parent=0
    #allocation2 [shape = 'u8[32768]{0}', space=vmem, size = 0x8000, scoped, tag = 'input window, operand 1, single buffered']
    #allocation3 [shape = 's32[2]{0}', space=sflag, size = 0x8, scoped, tag = 'scoped memory for tpu_custom_call.1']
    #allocation4 [shape = 's32[2]{0}', space=sflag, size = 0x8, scoped, tag = 'scoped memory for tpu_custom_call.1']
    #allocation5 [shape = 'u8[32768]{0}', space=vmem, size = 0x8000, scoped, tag = 'input window, operand 2, single buffered']
    #allocation6 [shape = 's32[1]{0}', space=sflag, size = 0x4, scoped, tag = 'scoped memory for tpu_custom_call.1']
    #allocation7 [shape = 'u8[8192]{0}', space=vmem, size = 0x2000, scoped, tag = 'output window, operand 0']
    %9 = vsyncpa [#allocation3], 0
    %10 = vsyncpa [#allocation6], 0
    %11 = vsyncpa [#allocation4], 0
    %s12 = scalar_lea.sflag [#allocation4], 1
    %13 = vsyncpa %s12, 0
    loop: start=0, step=1, limit=4
    $region2: #{tpu_custom_call.1} parent=1 // loop_pre_header
      _
    $region3: #{tpu_custom_call.1} parent=1 // loop_header
      %s15 = sphi 0, %s19
      %p16 = scmp.ge.s32.totalorder %s15, 4
      %s25 = sphi 0, %s27
      %s28 = sphi 0, %s25
      %s29 = sphi 0, %s28
      %s45 = sphi 0, %s29
      %s49 = sphi 0, %s49
      %s51 = sphi 0, %s49
      %s52 = sphi 0, %s51
      %s66 = sphi 0, %s52
      %s70 = sphi 0, %s70
      %s72 = sphi 0, %s70
      %s73 = sphi 0, %s72
      %s87 = sphi 0, %s73
      %s91 = sphi 0, %s91
      %s93 = sphi 0, %s91
      %s94 = sphi 0, %s93
      %s108 = sphi 0, %s94
      %s114 = sphi 0, %s116
      %s117 = sphi 0, %s114
      %s118 = sphi 0, %s117
      %s134 = sphi 0, %s118
    $region4: #{tpu_custom_call.1} parent=1 // loop_header_branch
      %18 = sbr.rel (%p16) target = $region8
    $region5: #{tpu_custom_call.1} parent=1 // loop_body
      %s20 = ssub.s32 %s15, 1
      %s21 = ssub.s32 %s15, 2
      %s22 = sadd.s32 %s15, 1
      %s23 = ssub.s32 %s15, %s22
      %p24 = scmp.eq.s32.totalorder %s23, 0
      %s26 = sadd.s32 %s25, 1
      %s27 = scalar_select %p24, %s25, %s26
      %p30 = pneg %p24
      %p31 = scmp.eq.s32.totalorder %s15, 1
      %p32 = por %p30, %p31
      %p33 = scmp.ne.s32.totalorder %s25, %s28
      %p34 = scmp.eq.s32.totalorder %s15, 0
      %p35 = por %p33, %p34
      %p36 = scmp.ne.s32.totalorder %s25, %s28
      %p37 = scmp.eq.s32.totalorder %s20, 1
      %p38 = por %p36, %p37
      %p39 = scmp.ne.s32.totalorder %s28, %s29
      %p40 = scmp.eq.s32.totalorder %s20, 0
      %p41 = por %p39, %p40
      %p42 = scmp.ne.s32.totalorder %s28, %s29
      %p43 = scmp.eq.s32.totalorder %s21, 1
      %p44 = por %p42, %p43
      %p46 = scmp.ne.s32.totalorder %s29, %s45
      %p47 = scmp.eq.s32.totalorder %s21, 0
      %p48 = por %p46, %p47
      %s50 = sadd.s32 %s49, 1
      %p53 = scmp.eq.s32.totalorder %s15, 1
      %p54 = scmp.ne.s32.totalorder %s49, %s51
      %p55 = scmp.eq.s32.totalorder %s15, 0
      %p56 = por %p54, %p55
      %p57 = scmp.ne.s32.totalorder %s49, %s51
      %p58 = scmp.eq.s32.totalorder %s20, 1
      %p59 = por %p57, %p58
      %p60 = scmp.ne.s32.totalorder %s51, %s52
      %p61 = scmp.eq.s32.totalorder %s20, 0
      %p62 = por %p60, %p61
      %p63 = scmp.ne.s32.totalorder %s51, %s52
      %p64 = scmp.eq.s32.totalorder %s21, 1
      %p65 = por %p63, %p64
      %p67 = scmp.ne.s32.totalorder %s52, %s66
      %p68 = scmp.eq.s32.totalorder %s21, 0
      %p69 = por %p67, %p68
      %s71 = sadd.s32 %s70, 1
      %p74 = scmp.eq.s32.totalorder %s15, 1
      %p75 = scmp.ne.s32.totalorder %s70, %s72
      %p76 = scmp.eq.s32.totalorder %s15, 0
      %p77 = por %p75, %p76
      %p78 = scmp.ne.s32.totalorder %s70, %s72
      %p79 = scmp.eq.s32.totalorder %s20, 1
      %p80 = por %p78, %p79
      %p81 = scmp.ne.s32.totalorder %s72, %s73
      %p82 = scmp.eq.s32.totalorder %s20, 0
      %p83 = por %p81, %p82
      %p84 = scmp.ne.s32.totalorder %s72, %s73
      %p85 = scmp.eq.s32.totalorder %s21, 1
      %p86 = por %p84, %p85
      %p88 = scmp.ne.s32.totalorder %s73, %s87
      %p89 = scmp.eq.s32.totalorder %s21, 0
      %p90 = por %p88, %p89
      %s92 = sadd.s32 %s91, 1
      %p95 = scmp.eq.s32.totalorder %s15, 1
      %p96 = scmp.ne.s32.totalorder %s91, %s93
      %p97 = scmp.eq.s32.totalorder %s15, 0
      %p98 = por %p96, %p97
      %p99 = scmp.ne.s32.totalorder %s91, %s93
      %p100 = scmp.eq.s32.totalorder %s20, 1
      %p101 = por %p99, %p100
      %p102 = scmp.ne.s32.totalorder %s93, %s94
      %p103 = scmp.eq.s32.totalorder %s20, 0
      %p104 = por %p102, %p103
      %p105 = scmp.ne.s32.totalorder %s93, %s94
      %p106 = scmp.eq.s32.totalorder %s21, 1
      %p107 = por %p105, %p106
      %p109 = scmp.ne.s32.totalorder %s94, %s108
      %p110 = scmp.eq.s32.totalorder %s21, 0
      %p111 = por %p109, %p110
      %s112 = ssub.s32 %s15, %s22
      %p113 = scmp.eq.s32.totalorder %s112, 0
      %s115 = sadd.s32 %s114, 1
      %s116 = scalar_select %p113, %s114, %s115
      %p119 = pneg %p113
      %p120 = scmp.eq.s32.totalorder %s15, 1
      %p121 = por %p119, %p120
      %p122 = scmp.ne.s32.totalorder %s114, %s117
      %p123 = scmp.eq.s32.totalorder %s15, 0
      %p124 = por %p122, %p123
      %p125 = scmp.ne.s32.totalorder %s114, %s117
      %p126 = scmp.eq.s32.totalorder %s20, 1
      %p127 = por %p125, %p126
      %p128 = scmp.ne.s32.totalorder %s117, %s118
      %p129 = scmp.eq.s32.totalorder %s20, 0
      %p130 = por %p128, %p129
      %p131 = scmp.ne.s32.totalorder %s117, %s118
      %p132 = scmp.eq.s32.totalorder %s21, 1
      %p133 = por %p131, %p132
      %p135 = scmp.ne.s32.totalorder %s118, %s134
      %p136 = scmp.eq.s32.totalorder %s21, 0
      %p137 = por %p135, %p136
      %p138 = scmp.le.s32.totalorder 1, %s15
      %p139 = scmp.lt.s32.totalorder %s15, 3
      %p140 = pnand %p138, %p139
      %p141 = pneg %p140
      // Predicated region
      $region9: #{tpu_custom_call.1} parent=5 // pred_check
        _
      $region10: #{tpu_custom_call.1} parent=5 // pred_check_branch
        %143 = sbr.rel (%p140) target = $region12
      $region11: #{tpu_custom_call.1} parent=5 // pred_region
        %s144 = ssub.s32 %s15, 1
        // Predicated region
        $region13: #{tpu_custom_call.1} parent=11 // pred_check
          %p145 = pneg %p62
        $region14: #{tpu_custom_call.1} parent=11 // pred_check_branch
          %147 = sbr.rel (%p145) target = $region16
        $region15: #{tpu_custom_call.1} parent=11 // pred_region
          %s149 = ssub.s32 1024, 1024
          %150 = vsyncadd [#allocation3], %s149
          %s151 = sshll.u32 [#allocation2], 4
          %s152 = int_to_ptr.vmem [resolvable:$true] %s151
          %157 = dma.hbm_to_vmem [thread:$0]  %s1, 1024, %s152, [#allocation3], 64, 64, 4
        $region16: #{tpu_custom_call.1} parent=11 // pred_fallthru
          _
        // Predicated region
        $region17: #{tpu_custom_call.1} parent=11 // pred_check
          %p158 = pneg %p83
        $region18: #{tpu_custom_call.1} parent=11 // pred_check_branch
          %160 = sbr.rel (%p158) target = $region20
        $region19: #{tpu_custom_call.1} parent=11 // pred_region
          %s162 = ssub.s32 1024, 1024
          %163 = vsyncadd [#allocation6], %s162
          %s164 = sshll.u32 [#allocation5], 4
          %s165 = int_to_ptr.vmem [resolvable:$true] %s164
          %170 = dma.hbm_to_vmem [thread:$0]  %s2, 1024, %s165, [#allocation6], 64, 64, 4
        $region20: #{tpu_custom_call.1} parent=11 // pred_fallthru
          _
        // Predicated region
        $region21: #{tpu_custom_call.1} parent=11 // pred_check
          %p171 = pneg %p104
        $region22: #{tpu_custom_call.1} parent=11 // pred_check_branch
          %173 = sbr.rel (%p171) target = $region24
        $region23: #{tpu_custom_call.1} parent=11 // pred_region
          _
        $region24: #{tpu_custom_call.1} parent=11 // pred_fallthru
          _
      $region12: #{tpu_custom_call.1} parent=5 // pred_fallthru
        _
      %p174 = scmp.lt.s32.totalorder %s15, 2
      // Predicated region
      $region25: #{tpu_custom_call.1} parent=5 // pred_check
        %p175 = pneg %p174
      $region26: #{tpu_custom_call.1} parent=5 // pred_check_branch
        %177 = sbr.rel (%p175) target = $region28
      $region27: #{tpu_custom_call.1} parent=5 // pred_region
        // Predicated region
        $region29: #{tpu_custom_call.1} parent=27 // pred_check
          %p178 = pneg %p35
        $region30: #{tpu_custom_call.1} parent=27 // pred_check_branch
          %180 = sbr.rel (%p178) target = $region32
        $region31: #{tpu_custom_call.1} parent=27 // pred_region
          %p181 = scmp.lt.s32.totalorder %s15, 1
          %s182 = scalar_select %p181, %s15, 1
          %s183 = smul.addr %s182, 8
          %s184 = scalar_lea.vmem %s0, %s183
        $region32: #{tpu_custom_call.1} parent=27 // pred_fallthru
          _
      $region28: #{tpu_custom_call.1} parent=5 // pred_fallthru
        _
      %p185 = scmp.le.s32.totalorder 1, %s15
      %p186 = scmp.lt.s32.totalorder %s15, 3
      %p187 = pnand %p185, %p186
      %p188 = pneg %p187
      // Predicated region
      $region33: #{tpu_custom_call.1} parent=5 // pred_check
        _
      $region34: #{tpu_custom_call.1} parent=5 // pred_check_branch
        %190 = sbr.rel (%p187) target = $region36
      $region35: #{tpu_custom_call.1} parent=5 // pred_region
        %s191 = ssub.s32 %s15, 1
        // Predicated region
        $region37: #{tpu_custom_call.1} parent=35 // pred_check
          %p192 = pneg %p62
        $region38: #{tpu_custom_call.1} parent=35 // pred_check_branch
          %194 = sbr.rel (%p192) target = $region40
        $region39: #{tpu_custom_call.1} parent=35 // pred_region
          %195 = dma.done [#allocation3], 1024
        $region40: #{tpu_custom_call.1} parent=35 // pred_fallthru
          _
        // Predicated region
        $region41: #{tpu_custom_call.1} parent=35 // pred_check
          %p196 = pneg %p83
        $region42: #{tpu_custom_call.1} parent=35 // pred_check_branch
          %198 = sbr.rel (%p196) target = $region44
        $region43: #{tpu_custom_call.1} parent=35 // pred_region
          %199 = dma.done [#allocation6], 1024
        $region44: #{tpu_custom_call.1} parent=35 // pred_fallthru
          _
        %p200 = scmp.lt.s32.totalorder %s20, 1
        %s201 = scalar_select %p200, %s20, 1
        %s202 = smul.addr %s201, 8
        %s203 = scalar_lea.vmem %s0, %s202
        %p204 = pneg %p41
        %p205 = pneg %p38
        %p206 = pneg %p62
        %p207 = pneg %p59
        %p208 = pneg %p83
        %p209 = pneg %p80
        %p210 = pneg %p104
        %p211 = pneg %p101
        %p212 = pneg %p130
        %p213 = pneg %p127
        %s214 = sand.u32 %s117, 1
        %s215 = scalar_lea.sflag [#allocation4], %s214
        %s216 = sand.u32 %s117, 1
        %s217 = smul.addr %s216, 8
        %s218 = scalar_lea.vmem [#allocation7], %s217
        %p219 = scmp.lt.s32.totalorder %s20, 1
        %s220 = scalar_select %p219, %s20, 1
        %s221 = smul.addr %s220, 8
        %s222 = scalar_lea.vmem %s0, %s221
        %v224 = vld [vmem:[%s222] sm:$0xff]
        %vm225 = vcmp.ne.s32.totalorder %v224, 0
        %v226 = vsel %vm225, 1, 0
        %v227 = vcvt.s32.f32 %v226
        %vm228 = vcmask 64512
        %v229 = vsel %vm228, %v227, 0.0
        %230 = vadd.xlane.f32.xlu0 %v229
        %v231 = vpop.xlane.xlu0 %230
        %v232 = vmax.f32 %v231, 1.0
        %v233 = vlaneseq
        %v234 = vand.u32 %v233, 127
        %vm235 = vcmp.gt.s32.totalorder %v234, 0
        %236 = vset.pattern.permute.xlu0 0
        %237 = vperm.xlu0 %236, %v224
        %v238 = vpop.permute.xlu0 %237
        %vm239 = vcmp.eq.s32.totalorder %v234, %v238
        %vm240 = vmand %vm239, %vm235
        %v241 = vsel %vm240, 1, 0
        %v242 = vcvt.s32.f32 %v241
        %v243 = vadd.f32 %v242, 0.0
        %244 = vset.pattern.permute.xlu0 1
        %245 = vperm.xlu0 %244, %v224
        %v246 = vpop.permute.xlu0 %245
        %vm247 = vcmp.eq.s32.totalorder %v234, %v246
        %vm248 = vmand %vm247, %vm235
        %v249 = vsel %vm248, 1, 0
        %v250 = vcvt.s32.f32 %v249
        %v251 = vadd.f32 %v243, %v250
        %252 = vset.pattern.permute.xlu0 2
        %253 = vperm.xlu0 %252, %v224
        %v254 = vpop.permute.xlu0 %253
        %vm255 = vcmp.eq.s32.totalorder %v234, %v254
        %vm256 = vmand %vm255, %vm235
        %v257 = vsel %vm256, 1, 0
        %v258 = vcvt.s32.f32 %v257
        %v259 = vadd.f32 %v251, %v258
        %260 = vset.pattern.permute.xlu0 3
        %261 = vperm.xlu0 %260, %v224
        %v262 = vpop.permute.xlu0 %261
        %vm263 = vcmp.eq.s32.totalorder %v234, %v262
        %vm264 = vmand %vm263, %vm235
        %v265 = vsel %vm264, 1, 0
        %v266 = vcvt.s32.f32 %v265
        %v267 = vadd.f32 %v259, %v266
        %268 = vset.pattern.permute.xlu0 4
        %269 = vperm.xlu0 %268, %v224
        %v270 = vpop.permute.xlu0 %269
        %vm271 = vcmp.eq.s32.totalorder %v234, %v270
        %vm272 = vmand %vm271, %vm235
        %v273 = vsel %vm272, 1, 0
        %v274 = vcvt.s32.f32 %v273
        %v275 = vadd.f32 %v267, %v274
        %276 = vset.pattern.permute.xlu0 5
        %277 = vperm.xlu0 %276, %v224
        %v278 = vpop.permute.xlu0 %277
        %vm279 = vcmp.eq.s32.totalorder %v234, %v278
        %vm280 = vmand %vm279, %vm235
        %v281 = vsel %vm280, 1, 0
        %v282 = vcvt.s32.f32 %v281
        %v283 = vadd.f32 %v275, %v282
        %284 = vset.pattern.permute.xlu0 6
        %285 = vperm.xlu0 %284, %v224
        %v286 = vpop.permute.xlu0 %285
        %vm287 = vcmp.eq.s32.totalorder %v234, %v286
        %vm288 = vmand %vm287, %vm235
        %v289 = vsel %vm288, 1, 0
        %v290 = vcvt.s32.f32 %v289
        %v291 = vadd.f32 %v283, %v290
        %292 = vset.pattern.permute.xlu0 7
        %293 = vperm.xlu0 %292, %v224
        %v294 = vpop.permute.xlu0 %293
        %vm295 = vcmp.eq.s32.totalorder %v234, %v294
        %vm296 = vmand %vm295, %vm235
        %v297 = vsel %vm296, 1, 0
        %v298 = vcvt.s32.f32 %v297
        %v299 = vadd.f32 %v291, %v298
        %v300 = vpack.c.bf16 %v299, %v299
        %v301 = vld [vmem:[#allocation2] sm:$0xf]
        %v302 = vld [vmem:[#allocation2 + $0x4] sm:$0xf]
        %v303 = vld [vmem:[#allocation2 + $0x8] sm:$0xf]
        %v304 = vld [vmem:[#allocation2 + $0xc] sm:$0xf]
        %v305 = vld [vmem:[#allocation2 + $0x10] sm:$0xf]
        %v306 = vld [vmem:[#allocation2 + $0x14] sm:$0xf]
        %v307 = vld [vmem:[#allocation2 + $0x18] sm:$0xf]
        %v308 = vld [vmem:[#allocation2 + $0x1c] sm:$0xf]
        %v309 = vld [vmem:[#allocation2 + $0x20] sm:$0xf]
        %v310 = vld [vmem:[#allocation2 + $0x24] sm:$0xf]
        %v311 = vld [vmem:[#allocation2 + $0x28] sm:$0xf]
        %v312 = vld [vmem:[#allocation2 + $0x2c] sm:$0xf]
        %v313 = vld [vmem:[#allocation2 + $0x30] sm:$0xf]
        %v314 = vld [vmem:[#allocation2 + $0x34] sm:$0xf]
        %v315 = vld [vmem:[#allocation2 + $0x38] sm:$0xf]
        %v316 = vld [vmem:[#allocation2 + $0x3c] sm:$0xf]
        %v333 = vunpack.c.l.b16 %v301
        %v334 = vunpack.c.l.b16 %v302
        %v335 = vunpack.c.l.b16 %v303
        %v336 = vunpack.c.l.b16 %v304
        %v337 = vunpack.c.l.b16 %v305
        %v338 = vunpack.c.l.b16 %v306
        %v339 = vunpack.c.l.b16 %v307
        %v340 = vunpack.c.l.b16 %v308
        %v341 = vunpack.c.l.b16 %v309
        %v342 = vunpack.c.l.b16 %v310
        %v343 = vunpack.c.l.b16 %v311
        %v344 = vunpack.c.l.b16 %v312
        %v345 = vunpack.c.l.b16 %v313
        %v346 = vunpack.c.l.b16 %v314
        %v347 = vunpack.c.l.b16 %v315
        %v348 = vunpack.c.l.b16 %v316
        %v349 = vpack.c.b16 %v334, %v333
        %v350 = vpack.c.b16 %v336, %v335
        %v351 = vpack.c.b16 %v338, %v337
        %v352 = vpack.c.b16 %v340, %v339
        %v353 = vpack.c.b16 %v342, %v341
        %v354 = vpack.c.b16 %v344, %v343
        %v355 = vpack.c.b16 %v346, %v345
        %v356 = vpack.c.b16 %v348, %v347
        %365 = vmatprep.subr.bf16.mxu0 0
        %366 = vmatpush1.bf16.msra.mxu0 %v349
        %367 = vmatprep.subr.bf16.mxu0 0
        %368 = vmatpush1.bf16.msra.mxu0 %v350
        %369 = vmatprep.subr.bf16.mxu0 0
        %370 = vmatpush1.bf16.msra.mxu0 %v351
        %371 = vmatprep.subr.bf16.mxu0 0
        %372 = vmatpush1.bf16.msra.mxu0 %v352
        %373 = vmatprep.subr.bf16.mxu0 0
        %374 = vmatpush1.bf16.msra.mxu0 %v353
        %375 = vmatprep.subr.bf16.mxu0 0
        %376 = vmatpush1.bf16.msra.mxu0 %v354
        %377 = vmatprep.subr.bf16.mxu0 0
        %378 = vmatpush1.bf16.msra.mxu0 %v355
        %379 = vmatprep.subr.bf16.mxu0 0
        %380 = vmatpush1.bf16.msra.mxu0 %v356
        %381 = vmatprep.subr.bf16.mxu0 0
        %382 = vmatpush1.bf16.msra.mxu0 0
        %383 = vmatprep.subr.bf16.mxu0 0
        %384 = vmatpush1.bf16.msra.mxu0 0
        %385 = vmatprep.subr.bf16.mxu0 0
        %386 = vmatpush1.bf16.msra.mxu0 0
        %387 = vmatprep.subr.bf16.mxu0 0
        %388 = vmatpush1.bf16.msra.mxu0 0
        %389 = vmatprep.subr.bf16.mxu0 0
        %390 = vmatpush1.bf16.msra.mxu0 0
        %391 = vmatprep.subr.bf16.mxu0 0
        %392 = vmatpush1.bf16.msra.mxu0 0
        %393 = vmatprep.subr.bf16.mxu0 0
        %394 = vmatpush1.bf16.msra.mxu0 0
        %395 = vmatprep.subr.bf16.mxu0 0
        %396 = vmatpush1.bf16.msra.mxu0 0
        %397 = vmatprep.mubr.bf16.mxu0 0
        %398 = vmatmul.mubr.bf16.gmra.mrb[0].mxu0 %v300
        %v399 = vpop.f32.mrb[0].mxu0
        %v400 = vadd.f32 0.0, %v399
        %v401 = vpop.f32.mrb[0].mxu0
        %v402 = vpop.f32.mrb[0].mxu0
        %v403 = vpop.f32.mrb[0].mxu0
        %404 = vdwg.mxu0
        %v405 = vrcp.pop %v232
        %v406 = vmul.f32 %v400, %v405
        %v407 = vpack.c.bf16 %v406, %v406
        %v408 = vld [vmem:[#allocation5] sm:$0xf]
        %v409 = vld [vmem:[#allocation5 + $0x4] sm:$0xf]
        %v410 = vld [vmem:[#allocation5 + $0x8] sm:$0xf]
        %v411 = vld [vmem:[#allocation5 + $0xc] sm:$0xf]
        %v412 = vld [vmem:[#allocation5 + $0x10] sm:$0xf]
        %v413 = vld [vmem:[#allocation5 + $0x14] sm:$0xf]
        %v414 = vld [vmem:[#allocation5 + $0x18] sm:$0xf]
        %v415 = vld [vmem:[#allocation5 + $0x1c] sm:$0xf]
        %v416 = vld [vmem:[#allocation5 + $0x20] sm:$0xf]
        %v417 = vld [vmem:[#allocation5 + $0x24] sm:$0xf]
        %v418 = vld [vmem:[#allocation5 + $0x28] sm:$0xf]
        %v419 = vld [vmem:[#allocation5 + $0x2c] sm:$0xf]
        %v420 = vld [vmem:[#allocation5 + $0x30] sm:$0xf]
        %v421 = vld [vmem:[#allocation5 + $0x34] sm:$0xf]
        %v422 = vld [vmem:[#allocation5 + $0x38] sm:$0xf]
        %v423 = vld [vmem:[#allocation5 + $0x3c] sm:$0xf]
        %v424 = vld [vmem:[%s3] sm:$0x1]
        %v426 = vlaneseq
        %v427 = vshrl.u32 %v426, 7
        %v428 = vsub.s32 0, %v427
        %v429 = vrot.slane %v424, %v428
        %v447 = vunpack.c.l.b16 %v408
        %v448 = vunpack.c.l.b16 %v409
        %v449 = vunpack.c.l.b16 %v410
        %v450 = vunpack.c.l.b16 %v411
        %v451 = vunpack.c.l.b16 %v412
        %v452 = vunpack.c.l.b16 %v413
        %v453 = vunpack.c.l.b16 %v414
        %v454 = vunpack.c.l.b16 %v415
        %v455 = vunpack.c.l.b16 %v416
        %v456 = vunpack.c.l.b16 %v417
        %v457 = vunpack.c.l.b16 %v418
        %v458 = vunpack.c.l.b16 %v419
        %v459 = vunpack.c.l.b16 %v420
        %v460 = vunpack.c.l.b16 %v421
        %v461 = vunpack.c.l.b16 %v422
        %v462 = vunpack.c.l.b16 %v423
        %v463 = vpack.c.b16 %v448, %v447
        %v464 = vpack.c.b16 %v450, %v449
        %v465 = vpack.c.b16 %v452, %v451
        %v466 = vpack.c.b16 %v454, %v453
        %v467 = vpack.c.b16 %v456, %v455
        %v468 = vpack.c.b16 %v458, %v457
        %v469 = vpack.c.b16 %v460, %v459
        %v470 = vpack.c.b16 %v462, %v461
        %479 = vmatprep.subr.bf16.mxu0 0
        %480 = vmatpush1.bf16.msra.mxu0 %v463
        %481 = vmatprep.subr.bf16.mxu0 0
        %482 = vmatpush1.bf16.msra.mxu0 %v464
        %483 = vmatprep.subr.bf16.mxu0 0
        %484 = vmatpush1.bf16.msra.mxu0 %v465
        %485 = vmatprep.subr.bf16.mxu0 0
        %486 = vmatpush1.bf16.msra.mxu0 %v466
        %487 = vmatprep.subr.bf16.mxu0 0
        %488 = vmatpush1.bf16.msra.mxu0 %v467
        %489 = vmatprep.subr.bf16.mxu0 0
        %490 = vmatpush1.bf16.msra.mxu0 %v468
        %491 = vmatprep.subr.bf16.mxu0 0
        %492 = vmatpush1.bf16.msra.mxu0 %v469
        %493 = vmatprep.subr.bf16.mxu0 0
        %494 = vmatpush1.bf16.msra.mxu0 %v470
        %495 = vmatprep.subr.bf16.mxu0 0
        %496 = vmatpush1.bf16.msra.mxu0 0
        %497 = vmatprep.subr.bf16.mxu0 0
        %498 = vmatpush1.bf16.msra.mxu0 0
        %499 = vmatprep.subr.bf16.mxu0 0
        %500 = vmatpush1.bf16.msra.mxu0 0
        %501 = vmatprep.subr.bf16.mxu0 0
        %502 = vmatpush1.bf16.msra.mxu0 0
        %503 = vmatprep.subr.bf16.mxu0 0
        %504 = vmatpush1.bf16.msra.mxu0 0
        %505 = vmatprep.subr.bf16.mxu0 0
        %506 = vmatpush1.bf16.msra.mxu0 0
        %507 = vmatprep.subr.bf16.mxu0 0
        %508 = vmatpush1.bf16.msra.mxu0 0
        %509 = vmatprep.subr.bf16.mxu0 0
        %510 = vmatpush1.bf16.msra.mxu0 0
        %511 = vmatprep.mubr.bf16.mxu0 0
        %512 = vmatmul.mubr.bf16.gmra.mrb[0].mxu0 %v407
        %v513 = vpop.f32.mrb[0].mxu0
        %v514 = vadd.f32 %v429, %v513
        %v515 = vpop.f32.mrb[0].mxu0
        %v516 = vpop.f32.mrb[0].mxu0
        %v517 = vpop.f32.mrb[0].mxu0
        %518 = vdwg.mxu0
        %v519 = vmax.f32 %v514, 0.0
        %520 = vst [vmem:[%s218] sm:$0xff] %v519
        %s521 = sand.u32 %s117, 1
        %s522 = scalar_lea.sflag [#allocation4], %s521
        %s523 = sand.u32 %s117, 1
        %s524 = smul.addr %s523, 8
        %s525 = scalar_lea.vmem [#allocation7], %s524
        // Predicated region
        $region45: #{tpu_custom_call.1} parent=35 // pred_check
          %p526 = pneg %p127
        $region46: #{tpu_custom_call.1} parent=35 // pred_check_branch
          %528 = sbr.rel (%p526) target = $region48
        $region47: #{tpu_custom_call.1} parent=35 // pred_region
          %s530 = ssub.s32 128, 128
          %531 = vsyncadd %s522, %s530
          %s532 = smul.addr %s20, 128
          %s533 = scalar_lea.hbm %s4, %s532
          %s535 = sshll.u32 %s525, 4
          %s536 = int_to_ptr.vmem [resolvable:$true] %s535
          %538 = dma.vmem_to_hbm [thread:$0]  %s536, 128, %s533, %s522
        $region48: #{tpu_custom_call.1} parent=35 // pred_fallthru
          _
      $region36: #{tpu_custom_call.1} parent=5 // pred_fallthru
        _
      %p539 = scmp.le.s32.totalorder 2, %s15
      // Predicated region
      $region49: #{tpu_custom_call.1} parent=5 // pred_check
        %p540 = pneg %p539
      $region50: #{tpu_custom_call.1} parent=5 // pred_check_branch
        %542 = sbr.rel (%p540) target = $region52
      $region51: #{tpu_custom_call.1} parent=5 // pred_region
        %s543 = ssub.s32 %s15, 2
        // Predicated region
        $region53: #{tpu_custom_call.1} parent=51 // pred_check
          %p544 = pneg %p133
        $region54: #{tpu_custom_call.1} parent=51 // pred_check_branch
          %546 = sbr.rel (%p544) target = $region56
        $region55: #{tpu_custom_call.1} parent=51 // pred_region
          %s547 = sand.u32 %s118, 1
          %s548 = scalar_lea.sflag [#allocation4], %s547
          %s549 = sand.u32 %s118, 1
          %s550 = smul.addr %s549, 8
          %s551 = scalar_lea.vmem [#allocation7], %s550
          %552 = dma.done %s548, 128
        $region56: #{tpu_custom_call.1} parent=51 // pred_fallthru
          _
      $region52: #{tpu_custom_call.1} parent=5 // pred_fallthru
        _
    $region6: #{tpu_custom_call.1} parent=1 // loop_footer
      %s19 = sadd.s32 1, %s15
    $region7: #{tpu_custom_call.1} parent=1 // loop_footer_branch
      %14 = sbr.rel target = $region3
    $region8: #{tpu_custom_call.1} parent=1 // loop_exit
      _
    %553 = vsyncpa [#allocation3], 1
    %s554 = scalar_lea.sflag [#allocation3], 1
    %555 = vsyncpa %s554, 1
    %556 = vsyncpa [#allocation6], 1
    %557 = vsyncpa [#allocation4], 1
    %s558 = scalar_lea.sflag [#allocation4], 1
    %559 = vsyncpa %s558, 1

</llo_original>
